<compile_context>
chip_gen: v7x
topology: tpu7x:2x2x1
jax: 0.10.0
libtpu: 0.0.40
codegen_flags: <defaults>
</compile_context>

<pallas_src>
import jax
import jax.numpy as jnp
from jax.experimental import pallas as pl
from jax.experimental.pallas import tpu as pltpu

_LANE = 128
_SUBLANE = 8


def _round_up(a, m):
    return ((a + m - 1) // m) * m


def _pick_batch_tile(batch, feat, itemsize, block_b=None):
    """Rows per grid step, sized against a conservative per-core VMEM budget
    (v7x: 64 MiB/TC physical; streams are double-buffered by the pipeline)."""
    if block_b is None:
        feat_padded = _round_up(feat, _LANE)        # VMEM lane padding
        bytes_per_row = 3 * 2 * feat_padded * max(itemsize, 1)  # x, y, out x 2 bufs
        budget = 24 * 1024 * 1024                   # leaves headroom for weights
        block_b = max(budget // bytes_per_row, _SUBLANE)
        block_b = min(block_b, 8192)
    if block_b >= batch:
        return batch                                # single step, full-dim block
    return max((block_b // _SUBLANE) * _SUBLANE, _SUBLANE)


def attention_fusion_kernel(x_ref, y_ref, w1x_ref, w1y_ref, b1_ref, w2d_ref,
                            b2d_ref, out_ref):
    x = x_ref[...]                                  # (TB, D), native dtype
    y = y_ref[...]                                  # (TB, D), native dtype

    # Hidden layer: concat([X, Y]) @ W1 == X @ W1[:D] + Y @ W1[D:]   (MXU)
    h = (jnp.dot(x, w1x_ref[...], preferred_element_type=jnp.float32)
         + jnp.dot(y, w1y_ref[...], preferred_element_type=jnp.float32)
         + b1_ref[...])                             # (TB, H)
    h = jnp.maximum(h, 0.0)                         # ReLU

    # Two-way softmax == sigmoid of the logit difference (exact identity):
    #   w0 = exp(l0) / (exp(l0) + exp(l1)) = sigmoid(l0 - l1)
    # Mat-vec on the MXU (frees VPU/XLU work), exact divide for f32 parity.
    dl = (jnp.dot(h, w2d_ref[...], preferred_element_type=jnp.float32)
          + b2d_ref[...])                           # (TB, 1)
    w0 = 1.0 / (1.0 + jnp.exp(-dl))                 # softmax weight on X

    # fused = w0*x + (1-w0)*y == y + w0*(x - y)   (computed in f32, cast back)
    xf = x.astype(jnp.float32)
    yf = y.astype(jnp.float32)
    out_ref[...] = (yf + w0 * (xf - yf)).astype(out_ref.dtype)


def attention_fusion(x, y, w1, b1, w2, b2, *, block_b=None):
    """x: (B, Xd), y: (B, Yd) with Xd == Yd (required by the blend in the
    original module).  Weights follow nn.Linear math layout:
    w1 (Xd+Yd, 128), b1 (128,), w2 (128, 2), b2 (2,)."""
    B, D = x.shape
    assert y.shape == (B, D), "AttentionFusion blend requires X_dim == Y_dim"
    H = w1.shape[1]
    assert w1.shape == (2 * D, H)
    assert b1.shape == (H,)
    assert w2.shape == (H, 2)
    assert b2.shape == (2,)

    f32 = jnp.float32
    out_dtype = jnp.result_type(x.dtype, y.dtype)

    # Tiny, one-time weight prep (no full-array passes over x / y).
    w1x = w1[:D, :].astype(f32)                          # (D, H)   resident
    w1y = w1[D:, :].astype(f32)                          # (D, H)   resident
    b1r = b1.reshape(1, H).astype(f32)                   # (1, H)   resident
    w2d = (w2[:, 0] - w2[:, 1]).reshape(H, 1).astype(f32)  # (H, 1)  resident
    b2d = (b2[0] - b2[1]).reshape(1, 1).astype(f32)        # (1, 1)  resident

    itemsize = max(jnp.dtype(x.dtype).itemsize, jnp.dtype(y.dtype).itemsize,
                   jnp.dtype(out_dtype).itemsize)
    tb = _pick_batch_tile(B, D, itemsize, block_b)
    grid = (pl.cdiv(B, tb),)

    flops = 2 * B * (2 * D) * H + 4 * B * H + 4 * B + 3 * B * D
    bytes_accessed = int(2 * B * D * itemsize
                         + B * D * jnp.dtype(out_dtype).itemsize
                         + 4 * (2 * D * H + 2 * H + 1))

    return pl.pallas_call(
        attention_fusion_kernel,
        out_shape=jax.ShapeDtypeStruct((B, D), out_dtype),
        grid=grid,
        in_specs=[
            pl.BlockSpec((tb, D), lambda i: (i, 0)),     # x   (batch-tiled stream)
            pl.BlockSpec((tb, D), lambda i: (i, 0)),     # y   (batch-tiled stream)
            pl.BlockSpec((D, H), lambda i: (0, 0)),      # w1[:D]   (VMEM resident)
            pl.BlockSpec((D, H), lambda i: (0, 0)),      # w1[D:]   (VMEM resident)
            pl.BlockSpec((1, H), lambda i: (0, 0)),      # b1       (VMEM resident)
            pl.BlockSpec((H, 1), lambda i: (0, 0)),      # w2[:,0]-w2[:,1]
            pl.BlockSpec((1, 1), lambda i: (0, 0)),      # b2[0]-b2[1]
        ],
        out_specs=pl.BlockSpec((tb, D), lambda i: (i, 0)),
        compiler_params=pltpu.CompilerParams(
            dimension_semantics=("parallel",),
            vmem_limit_bytes=48 * 1024 * 1024,
        ),
        cost_estimate=pl.CostEstimate(
            flops=flops, transcendentals=B, bytes_accessed=bytes_accessed),
    )(x, y, w1x, w1y, b1r, w2d, b2d)


def reference(x, y, w1, b1, w2, b2):
    hp = jax.lax.Precision.HIGHEST
    combined = jnp.concatenate([x, y], axis=1)
    h = jax.nn.relu(jnp.dot(combined, w1, precision=hp) + b1)
    logits = jnp.dot(h, w2, precision=hp) + b2
    w = jax.nn.softmax(logits, axis=1)
    return w[:, 0:1] * x + w[:, 1:2] * y


if __name__ == "__main__":
    H = 128

    def make_inputs(key, B, D):
        kx, ky, kw1, kb1, kw2, kb2 = jax.random.split(key, 6)
        x = jax.random.normal(kx, (B, D), dtype=jnp.float32)
        y = jax.random.normal(ky, (B, D), dtype=jnp.float32)
        fan1 = 2 * D
        lim1 = 1.0 / fan1 ** 0.5
        w1 = jax.random.uniform(kw1, (fan1, H), jnp.float32, -lim1, lim1)
        b1 = jax.random.uniform(kb1, (H,), jnp.float32, -lim1, lim1)
        lim2 = 1.0 / H ** 0.5
        w2 = jax.random.uniform(kw2, (H, 2), jnp.float32, -lim2, lim2)
        b2 = jax.random.uniform(kb2, (2,), jnp.float32, -lim2, lim2)
        return x, y, w1, b1, w2, b2

    key = jax.random.PRNGKey(0)
    k_small, k_big = jax.random.split(key)

    # Small case (single grid step): B=16, X_dim = Y_dim = 32.
    x, y, w1, b1, w2, b2 = make_inputs(k_small, 16, 32)
    out = attention_fusion(x, y, w1, b1, w2, b2)
    jax.block_until_ready(out)
    ref = reference(x, y, w1, b1, w2, b2)
    assert out.shape == ref.shape
    # Tolerance covers XLA-vs-Mosaic f32 matmul pass differences; real bugs
    # (wrong slice / missing bias / swapped weights) are >= 1e-2 here.
    assert jnp.allclose(out, ref, atol=1e-3, rtol=1e-3), (
        "small-case mismatch, max abs err "
        f"{float(jnp.max(jnp.abs(out - ref)))}")

    # Multi-tile case (3 grid steps incl. a partial final tile) to exercise
    # the batch pipeline; explicit block_b keeps the test small.
    x2, y2, w12, b12, w22, b22 = make_inputs(k_big, 272, 32)
    out2 = attention_fusion(x2, y2, w12, b12, w22, b22, block_b=128)
    jax.block_until_ready(out2)
    ref2 = reference(x2, y2, w12, b12, w22, b22)
    assert jnp.allclose(out2, ref2, atol=1e-3, rtol=1e-3), (
        "tiled-case mismatch, max abs err "
        f"{float(jnp.max(jnp.abs(out2 - ref2)))}")

    print("KERNEL_OK")
</pallas_src>

<mosaic_0001>
module attributes {stable_mosaic.version = 11 : i64} {
  func.func @attention_fusion_kernel(%arg0: i32, %arg1: memref<16x32xf32, #tpu.memory_space<vmem>>, %arg2: memref<16x32xf32, #tpu.memory_space<vmem>>, %arg3: memref<32x128xf32, #tpu.memory_space<vmem>>, %arg4: memref<32x128xf32, #tpu.memory_space<vmem>>, %arg5: memref<1x128xf32, #tpu.memory_space<vmem>>, %arg6: memref<128x1xf32, #tpu.memory_space<vmem>>, %arg7: memref<1x1xf32, #tpu.memory_space<vmem>>, %arg8: memref<16x32xf32, #tpu.memory_space<vmem>>) attributes {dimension_semantics = [#tpu.dimension_semantics<parallel>], iteration_bounds = array<i64: 1>, scalar_prefetch = 0 : i64, scratch_operands = 0 : i64, tpu.core_type = #tpu.core_type<tc>, window_params = [{transform_indices = @transform_0, window_bounds = array<i64: 16, 32>}, {transform_indices = @transform_1, window_bounds = array<i64: 16, 32>}, {pipeline_mode = #tpu.pipeline_mode<synchronous>, transform_indices = @transform_2, window_bounds = array<i64: 32, 128>}, {pipeline_mode = #tpu.pipeline_mode<synchronous>, transform_indices = @transform_3, window_bounds = array<i64: 32, 128>}, {pipeline_mode = #tpu.pipeline_mode<synchronous>, transform_indices = @transform_4, window_bounds = array<i64: 1, 128>}, {pipeline_mode = #tpu.pipeline_mode<synchronous>, transform_indices = @transform_5, window_bounds = array<i64: 128, 1>}, {pipeline_mode = #tpu.pipeline_mode<synchronous>, transform_indices = @transform_6, window_bounds = array<i64: 1, 1>}, {transform_indices = @transform_7, window_bounds = array<i64: 16, 32>}]} {
    %c0 = arith.constant 0 : index
    %c0_0 = arith.constant 0 : index
    %0 = vector.load %arg1[%c0, %c0_0] : memref<16x32xf32, #tpu.memory_space<vmem>>, vector<16x32xf32>
    %c0_1 = arith.constant 0 : index
    %c0_2 = arith.constant 0 : index
    %1 = vector.load %arg2[%c0_1, %c0_2] : memref<16x32xf32, #tpu.memory_space<vmem>>, vector<16x32xf32>
    %c0_3 = arith.constant 0 : index
    %c0_4 = arith.constant 0 : index
    %2 = vector.load %arg3[%c0_3, %c0_4] : memref<32x128xf32, #tpu.memory_space<vmem>>, vector<32x128xf32>
    %cst = arith.constant dense<0.000000e+00> : vector<16x128xf32>
    %3 = tpu.matmul %0, %2, %cst {dimension_numbers = #tpu.dot_dimension_numbers<[1], [0], [0], [1], [0, 0, 1, 1], [], []>} : vector<16x32xf32>, vector<32x128xf32>, vector<16x128xf32> -> vector<16x128xf32>
    %c0_5 = arith.constant 0 : index
    %c0_6 = arith.constant 0 : index
    %4 = vector.load %arg4[%c0_5, %c0_6] : memref<32x128xf32, #tpu.memory_space<vmem>>, vector<32x128xf32>
    %cst_7 = arith.constant dense<0.000000e+00> : vector<16x128xf32>
    %5 = tpu.matmul %1, %4, %cst_7 {dimension_numbers = #tpu.dot_dimension_numbers<[1], [0], [0], [1], [0, 0, 1, 1], [], []>} : vector<16x32xf32>, vector<32x128xf32>, vector<16x128xf32> -> vector<16x128xf32>
    %6 = arith.addf %3, %5 : vector<16x128xf32>
    %c0_8 = arith.constant 0 : index
    %c0_9 = arith.constant 0 : index
    %7 = vector.load %arg5[%c0_8, %c0_9] : memref<1x128xf32, #tpu.memory_space<vmem>>, vector<1x128xf32>
    %8 = vector.broadcast %7 : vector<1x128xf32> to vector<16x128xf32>
    %9 = arith.addf %6, %8 : vector<16x128xf32>
    %cst_10 = arith.constant 0.000000e+00 : f32
    %10 = vector.broadcast %cst_10 : f32 to vector<16x128xf32>
    %11 = arith.maximumf %9, %10 : vector<16x128xf32>
    %c0_11 = arith.constant 0 : index
    %c0_12 = arith.constant 0 : index
    %12 = vector.load %arg6[%c0_11, %c0_12] : memref<128x1xf32, #tpu.memory_space<vmem>>, vector<128x1xf32>
    %cst_13 = arith.constant dense<0.000000e+00> : vector<16x1xf32>
    %13 = tpu.matmul %11, %12, %cst_13 {dimension_numbers = #tpu.dot_dimension_numbers<[1], [0], [0], [1], [0, 0, 1, 1], [], []>} : vector<16x128xf32>, vector<128x1xf32>, vector<16x1xf32> -> vector<16x1xf32>
    %c0_14 = arith.constant 0 : index
    %c0_15 = arith.constant 0 : index
    %14 = vector.load %arg7[%c0_14, %c0_15] : memref<1x1xf32, #tpu.memory_space<vmem>>, vector<1x1xf32>
    %15 = vector.broadcast %14 : vector<1x1xf32> to vector<16x1xf32>
    %16 = arith.addf %13, %15 : vector<16x1xf32>
    %cst_16 = arith.constant 0.000000e+00 : f32
    %17 = vector.broadcast %cst_16 : f32 to vector<16x1xf32>
    %18 = arith.subf %17, %16 : vector<16x1xf32>
    %19 = math.exp %18 : vector<16x1xf32>
    %cst_17 = arith.constant 1.000000e+00 : f32
    %20 = vector.broadcast %cst_17 : f32 to vector<16x1xf32>
    %21 = arith.addf %20, %19 : vector<16x1xf32>
    %cst_18 = arith.constant 1.000000e+00 : f32
    %22 = vector.broadcast %cst_18 : f32 to vector<16x1xf32>
    %23 = arith.divf %22, %21 : vector<16x1xf32>
    %24 = arith.subf %0, %1 : vector<16x32xf32>
    %25 = vector.broadcast %23 : vector<16x1xf32> to vector<16x32xf32>
    %26 = arith.mulf %25, %24 : vector<16x32xf32>
    %27 = arith.addf %1, %26 : vector<16x32xf32>
    %c0_19 = arith.constant 0 : index
    %c0_20 = arith.constant 0 : index
    %28 = vector.load %arg8[%c0_19, %c0_20] : memref<16x32xf32, #tpu.memory_space<vmem>>, vector<16x32xf32>
    tpu.vector_store %arg8[%c0_19, %c0_20], %27 {strides = array<i32>} : memref<16x32xf32, #tpu.memory_space<vmem>>, vector<16x32xf32>,
    return
  }
  func.func @transform_0(%arg0: i32) -> (i32, i32) {
    %c0_i32 = arith.constant 0 : i32
    %c0_i32_0 = arith.constant 0 : i32
    return %arg0, %c0_i32 : i32, i32
  }
  func.func @transform_1(%arg0: i32) -> (i32, i32) {
    %c0_i32 = arith.constant 0 : i32
    %c0_i32_0 = arith.constant 0 : i32
    return %arg0, %c0_i32 : i32, i32
  }
  func.func @transform_2(%arg0: i32) -> (i32, i32) {
    %c0_i32 = arith.constant 0 : i32
    %c0_i32_0 = arith.constant 0 : i32
    %c0_i32_1 = arith.constant 0 : i32
    return %c0_i32, %c0_i32_0 : i32, i32
  }
  func.func @transform_3(%arg0: i32) -> (i32, i32) {
    %c0_i32 = arith.constant 0 : i32
    %c0_i32_0 = arith.constant 0 : i32
    %c0_i32_1 = arith.constant 0 : i32
    return %c0_i32, %c0_i32_0 : i32, i32
  }
  func.func @transform_4(%arg0: i32) -> (i32, i32) {
    %c0_i32 = arith.constant 0 : i32
    %c0_i32_0 = arith.constant 0 : i32
    %c0_i32_1 = arith.constant 0 : i32
    return %c0_i32, %c0_i32_0 : i32, i32
  }
  func.func @transform_5(%arg0: i32) -> (i32, i32) {
    %c0_i32 = arith.constant 0 : i32
    %c0_i32_0 = arith.constant 0 : i32
    %c0_i32_1 = arith.constant 0 : i32
    return %c0_i32, %c0_i32_0 : i32, i32
  }
  func.func @transform_6(%arg0: i32) -> (i32, i32) {
    %c0_i32 = arith.constant 0 : i32
    %c0_i32_0 = arith.constant 0 : i32
    %c0_i32_1 = arith.constant 0 : i32
    return %c0_i32, %c0_i32_0 : i32, i32
  }
  func.func @transform_7(%arg0: i32) -> (i32, i32) {
    %c0_i32 = arith.constant 0 : i32
    %c0_i32_0 = arith.constant 0 : i32
    return %arg0, %c0_i32 : i32, i32
  }
}

</mosaic_0001>

<llo_original>
// kernel: tpu_custom_call.1
$region0: #{tpu_custom_call.1}
  #allocation0 [shape = 'u32[]', space=smem, size = 0x4, offset = 0x4, fixed_abs, tag = 'smem constant byte address 0x4 - core index']
  #allocation1 [shape = 'u32[144,128]{1,0:T(1,128)}', space=vmem, size = 0x12000, scoped, tag = 'internal scratch']
  #allocation2 [shape = 'f32[1,1]{1,0:T(1,128)S(1)}', space=vmem, size = 0x200, scoped, tag = 'scoped memory for tpu_custom_call.1']
  %s0 = inlined_call_operand.vmem [shape: f32[16,32], index: 0, kind: input, shape index: {}]
  %s1 = inlined_call_operand.vmem [shape: f32[16,32], index: 1, kind: input, shape index: {}]
  %s2 = inlined_call_operand.vmem [shape: f32[32,128], index: 2, kind: input, shape index: {}]
  %s3 = inlined_call_operand.vmem [shape: f32[32,128], index: 3, kind: input, shape index: {}]
  %s4 = inlined_call_operand.vmem [shape: f32[1,128], index: 4, kind: input, shape index: {}]
  %s5 = inlined_call_operand.vmem [shape: f32[128,1], index: 5, kind: input, shape index: {}]
  %s6 = inlined_call_operand.<no memory space> [shape: f32[1,1], index: 6, kind: input, shape index: {}]
  %s7 = inlined_call_operand.hbm [shape: f32[16,32], index: 7, kind: output, shape index: {}]
  %s8 = sld [smem:[#allocation0]]
  $region38: #{tpu_custom_call.1} parent=0
    _
  %s10 = ssub.s32 1, %s8
  %s11 = scalar_select 0, %s10, %s8
  %v12 = vstv %s6
  %13 = vst [vmem:[#allocation2] sm:$0x1] %v12
  $region1: #{tpu_custom_call.1} parent=0
    #allocation3 [shape = 'u8[8192]{0}', space=vmem, size = 0x2000, scoped, tag = 'output window, operand 0, single buffered']
    #allocation4 [shape = 's32[1]{0}', space=sflag, size = 0x4, scoped, tag = 'scoped memory for tpu_custom_call.1']
    %14 = vsyncpa [#allocation4], 0
    // Predicated region
    $region2: #{tpu_custom_call.1} parent=1 // pred_check
      _
    $region3: #{tpu_custom_call.1} parent=1 // pred_check_branch
      %16 = sbr.rel (0) target = $region5
    $region4: #{tpu_custom_call.1} parent=1 // pred_region
      _
    $region5: #{tpu_custom_call.1} parent=1 // pred_fallthru
      _
    // Predicated region
    $region6: #{tpu_custom_call.1} parent=1 // pred_check
      _
    $region7: #{tpu_custom_call.1} parent=1 // pred_check_branch
      %18 = sbr.rel (0) target = $region9
    $region8: #{tpu_custom_call.1} parent=1 // pred_region
      _
    $region9: #{tpu_custom_call.1} parent=1 // pred_fallthru
      _
    // Predicated region
    $region10: #{tpu_custom_call.1} parent=1 // pred_check
      _
    $region11: #{tpu_custom_call.1} parent=1 // pred_check_branch
      %20 = sbr.rel (0) target = $region13
    $region12: #{tpu_custom_call.1} parent=1 // pred_region
      _
    $region13: #{tpu_custom_call.1} parent=1 // pred_fallthru
      _
    // Predicated region
    $region14: #{tpu_custom_call.1} parent=1 // pred_check
      _
    $region15: #{tpu_custom_call.1} parent=1 // pred_check_branch
      %22 = sbr.rel (0) target = $region17
    $region16: #{tpu_custom_call.1} parent=1 // pred_region
      _
    $region17: #{tpu_custom_call.1} parent=1 // pred_fallthru
      _
    // Predicated region
    $region18: #{tpu_custom_call.1} parent=1 // pred_check
      _
    $region19: #{tpu_custom_call.1} parent=1 // pred_check_branch
      %24 = sbr.rel (0) target = $region21
    $region20: #{tpu_custom_call.1} parent=1 // pred_region
      _
    $region21: #{tpu_custom_call.1} parent=1 // pred_fallthru
      _
    // Predicated region
    $region22: #{tpu_custom_call.1} parent=1 // pred_check
      _
    $region23: #{tpu_custom_call.1} parent=1 // pred_check_branch
      %26 = sbr.rel (0) target = $region25
    $region24: #{tpu_custom_call.1} parent=1 // pred_region
      _
    $region25: #{tpu_custom_call.1} parent=1 // pred_fallthru
      _
    // Predicated region
    $region26: #{tpu_custom_call.1} parent=1 // pred_check
      _
    $region27: #{tpu_custom_call.1} parent=1 // pred_check_branch
      %28 = sbr.rel (0) target = $region29
    $region28: #{tpu_custom_call.1} parent=1 // pred_region
      _
    $region29: #{tpu_custom_call.1} parent=1 // pred_fallthru
      _
    %v29 = vld [vmem:[%s0] sm:$0xff]
    %v30 = vld [vmem:[%s0 + $0x8] sm:$0xff]
    %v31 = vld [vmem:[%s1] sm:$0xff]
    %v32 = vld [vmem:[%s1 + $0x8] sm:$0xff]
    %v33 = vld [vmem:[%s2] sm:$0xff]
    %v34 = vld [vmem:[%s2 + $0x8] sm:$0xff]
    %v35 = vld [vmem:[%s2 + $0x10] sm:$0xff]
    %v36 = vld [vmem:[%s2 + $0x18] sm:$0xff]
    %v37 = vld [vmem:[%s3] sm:$0xff]
    %v38 = vld [vmem:[%s3 + $0x8] sm:$0xff]
    %v39 = vld [vmem:[%s3 + $0x10] sm:$0xff]
    %v40 = vld [vmem:[%s3 + $0x18] sm:$0xff]
    %vm41 = vcmask 261120
    %v43 = vsel %vm41, %v31, 0
    %v46 = vsel %vm41, %v32, 0
    %48 = vmatprep.subr.mxu0 0.0
    %49 = vmatpush1.msra.mxu0 %v37
    %50 = vmatprep.subr.mxu0 0.0
    %51 = vmatpush1.msra.mxu0 %v38
    %52 = vmatprep.subr.mxu0 0.0
    %53 = vmatpush1.msra.mxu0 %v39
    %54 = vmatprep.subr.mxu0 0.0
    %55 = vmatpush1.msra.mxu0 %v40
    %56 = vmatprep.subr.mxu0 0.0
    %57 = vmatpush1.msra.mxu0 0.0
    %58 = vmatprep.subr.mxu0 0.0
    %59 = vmatpush1.msra.mxu0 0.0
    %60 = vmatprep.subr.mxu0 0.0
    %61 = vmatpush1.msra.mxu0 0.0
    %62 = vmatprep.subr.mxu0 0.0
    %63 = vmatpush1.msra.mxu0 0.0
    %64 = vmatprep.subr.mxu0 0.0
    %65 = vmatpush1.msra.mxu0 0.0
    %66 = vmatprep.subr.mxu0 0.0
    %67 = vmatpush1.msra.mxu0 0.0
    %68 = vmatprep.subr.mxu0 0.0
    %69 = vmatpush1.msra.mxu0 0.0
    %70 = vmatprep.subr.mxu0 0.0
    %71 = vmatpush1.msra.mxu0 0.0
    %72 = vmatprep.subr.mxu0 0.0
    %73 = vmatpush1.msra.mxu0 0.0
    %74 = vmatprep.subr.mxu0 0.0
    %75 = vmatpush1.msra.mxu0 0.0
    %76 = vmatprep.subr.mxu0 0.0
    %77 = vmatpush1.msra.mxu0 0.0
    %78 = vmatprep.subr.mxu0 0.0
    %79 = vmatpush1.msra.mxu0 0.0
    %80 = vmatprep.subr.mxu0 0.0
    %81 = vmatpush1.msra.mxu0 0.0
    %82 = vmatprep.subr.mxu0 0.0
    %83 = vmatpush1.msra.mxu0 0.0
    %84 = vmatprep.subr.mxu0 0.0
    %85 = vmatpush1.msra.mxu0 0.0
    %86 = vmatprep.subr.mxu0 0.0
    %87 = vmatpush1.msra.mxu0 0.0
    %88 = vmatprep.subr.mxu0 0.0
    %89 = vmatpush1.msra.mxu0 0.0
    %90 = vmatprep.subr.mxu0 0.0
    %91 = vmatpush1.msra.mxu0 0.0
    %92 = vmatprep.subr.mxu0 0.0
    %93 = vmatpush1.msra.mxu0 0.0
    %94 = vmatprep.subr.mxu0 0.0
    %95 = vmatpush1.msra.mxu0 0.0
    %96 = vmatprep.subr.mxu0 0.0
    %97 = vmatpush1.msra.mxu0 0.0
    %98 = vmatprep.subr.mxu0 0.0
    %99 = vmatpush1.msra.mxu0 0.0
    %100 = vmatprep.subr.mxu0 0.0
    %101 = vmatpush1.msra.mxu0 0.0
    %102 = vmatprep.subr.mxu0 0.0
    %103 = vmatpush1.msra.mxu0 0.0
    %104 = vmatprep.subr.mxu0 0.0
    %105 = vmatpush1.msra.mxu0 0.0
    %106 = vmatprep.subr.mxu0 0.0
    %107 = vmatpush1.msra.mxu0 0.0
    %108 = vmatprep.subr.mxu0 0.0
    %109 = vmatpush1.msra.mxu0 0.0
    %110 = vmatprep.subr.mxu0 0.0
    %111 = vmatpush1.msra.mxu0 0.0
    %112 = vmatprep.mubr.f32.mxu0 0.0
    %113 = vmatmul.mubr.f32.gmra.mrb[0].mxu0 %v43
    %v114 = vpop.f32.mrb[0].mxu0
    %v115 = vadd.f32 0.0, %v114
    %v116 = vpop.f32.mrb[0].mxu0
    %117 = vmatprep.mubr.f32.mxu0 0.0
    %118 = vmatmul.mubr.f32.gmra.mrb[0].mxu0 %v46
    %v119 = vpop.f32.mrb[0].mxu0
    %v120 = vadd.f32 0.0, %v119
    %v121 = vpop.f32.mrb[0].mxu0
    %122 = vdwg.mxu0
    %v124 = vsel %vm41, %v29, 0
    %v127 = vsel %vm41, %v30, 0
    %129 = vmatprep.subr.mxu0 0.0
    %130 = vmatpush1.msra.mxu0 %v33
    %131 = vmatprep.subr.mxu0 0.0
    %132 = vmatpush1.msra.mxu0 %v34
    %133 = vmatprep.subr.mxu0 0.0
    %134 = vmatpush1.msra.mxu0 %v35
    %135 = vmatprep.subr.mxu0 0.0
    %136 = vmatpush1.msra.mxu0 %v36
    %137 = vmatprep.subr.mxu0 0.0
    %138 = vmatpush1.msra.mxu0 0.0
    %139 = vmatprep.subr.mxu0 0.0
    %140 = vmatpush1.msra.mxu0 0.0
    %141 = vmatprep.subr.mxu0 0.0
    %142 = vmatpush1.msra.mxu0 0.0
    %143 = vmatprep.subr.mxu0 0.0
    %144 = vmatpush1.msra.mxu0 0.0
    %145 = vmatprep.subr.mxu0 0.0
    %146 = vmatpush1.msra.mxu0 0.0
    %147 = vmatprep.subr.mxu0 0.0
    %148 = vmatpush1.msra.mxu0 0.0
    %149 = vmatprep.subr.mxu0 0.0
    %150 = vmatpush1.msra.mxu0 0.0
    %151 = vmatprep.subr.mxu0 0.0
    %152 = vmatpush1.msra.mxu0 0.0
    %153 = vmatprep.subr.mxu0 0.0
    %154 = vmatpush1.msra.mxu0 0.0
    %155 = vmatprep.subr.mxu0 0.0
    %156 = vmatpush1.msra.mxu0 0.0
    %157 = vmatprep.subr.mxu0 0.0
    %158 = vmatpush1.msra.mxu0 0.0
    %159 = vmatprep.subr.mxu0 0.0
    %160 = vmatpush1.msra.mxu0 0.0
    %161 = vmatprep.subr.mxu0 0.0
    %162 = vmatpush1.msra.mxu0 0.0
    %163 = vmatprep.subr.mxu0 0.0
    %164 = vmatpush1.msra.mxu0 0.0
    %165 = vmatprep.subr.mxu0 0.0
    %166 = vmatpush1.msra.mxu0 0.0
    %167 = vmatprep.subr.mxu0 0.0
    %168 = vmatpush1.msra.mxu0 0.0
    %169 = vmatprep.subr.mxu0 0.0
    %170 = vmatpush1.msra.mxu0 0.0
    %171 = vmatprep.subr.mxu0 0.0
    %172 = vmatpush1.msra.mxu0 0.0
    %173 = vmatprep.subr.mxu0 0.0
    %174 = vmatpush1.msra.mxu0 0.0
    %175 = vmatprep.subr.mxu0 0.0
    %176 = vmatpush1.msra.mxu0 0.0
    %177 = vmatprep.subr.mxu0 0.0
    %178 = vmatpush1.msra.mxu0 0.0
    %179 = vmatprep.subr.mxu0 0.0
    %180 = vmatpush1.msra.mxu0 0.0
    %181 = vmatprep.subr.mxu0 0.0
    %182 = vmatpush1.msra.mxu0 0.0
    %183 = vmatprep.subr.mxu0 0.0
    %184 = vmatpush1.msra.mxu0 0.0
    %185 = vmatprep.subr.mxu0 0.0
    %186 = vmatpush1.msra.mxu0 0.0
    %187 = vmatprep.subr.mxu0 0.0
    %188 = vmatpush1.msra.mxu0 0.0
    %189 = vmatprep.subr.mxu0 0.0
    %190 = vmatpush1.msra.mxu0 0.0
    %191 = vmatprep.subr.mxu0 0.0
    %192 = vmatpush1.msra.mxu0 0.0
    %193 = vmatprep.mubr.f32.mxu0 0.0
    %194 = vmatmul.mubr.f32.gmra.mrb[0].mxu0 %v124
    %v195 = vpop.f32.mrb[0].mxu0
    %v196 = vadd.f32 %v115, %v195
    %v197 = vpop.f32.mrb[0].mxu0
    %198 = vmatprep.mubr.f32.mxu0 0.0
    %199 = vmatmul.mubr.f32.gmra.mrb[0].mxu0 %v127
    %v200 = vpop.f32.mrb[0].mxu0
    %v201 = vadd.f32 %v120, %v200
    %v202 = vpop.f32.mrb[0].mxu0
    %203 = vdwg.mxu0
    %v204 = vld [vmem:[%s4] sm:$0x1]
    %v206 = vlaneseq
    %v207 = vshrl.u32 %v206, 7
    %v208 = vsub.s32 0, %v207
    %v209 = vrot.slane %v204, %v208
    %v211 = vadd.f32 %v196, %v209
    %v212 = vadd.f32 %v201, %v209
    %v213 = vmax.f32 %v211, 0.0
    %v214 = vmax.f32 %v212, 0.0
    %v215 = vld [vmem:[%s5] sm:$0xff]
    %v216 = vld [vmem:[%s5 + $0x8] sm:$0xff]
    %v217 = vld [vmem:[%s5 + $0x10] sm:$0xff]
    %v218 = vld [vmem:[%s5 + $0x18] sm:$0xff]
    %v219 = vld [vmem:[%s5 + $0x20] sm:$0xff]
    %v220 = vld [vmem:[%s5 + $0x28] sm:$0xff]
    %v221 = vld [vmem:[%s5 + $0x30] sm:$0xff]
    %v222 = vld [vmem:[%s5 + $0x38] sm:$0xff]
    %v223 = vld [vmem:[%s5 + $0x40] sm:$0xff]
    %v224 = vld [vmem:[%s5 + $0x48] sm:$0xff]
    %v225 = vld [vmem:[%s5 + $0x50] sm:$0xff]
    %v226 = vld [vmem:[%s5 + $0x58] sm:$0xff]
    %v227 = vld [vmem:[%s5 + $0x60] sm:$0xff]
    %v228 = vld [vmem:[%s5 + $0x68] sm:$0xff]
    %v229 = vld [vmem:[%s5 + $0x70] sm:$0xff]
    %v230 = vld [vmem:[%s5 + $0x78] sm:$0xff]
    %v231 = vld [vmem:[#allocation2] sm:$0x1]
    %v233 = vlaneseq
    %v234 = vshrl.u32 %v233, 7
    %v235 = vsub.s32 0, %v234
    %v236 = vrot.slane %v231, %v235
    %238 = vmatprep.subr.mxu0 0.0
    %239 = vmatpush1.msra.mxu0 %v215
    %240 = vmatprep.subr.mxu0 0.0
    %241 = vmatpush1.msra.mxu0 %v216
    %242 = vmatprep.subr.mxu0 0.0
    %243 = vmatpush1.msra.mxu0 %v217
    %244 = vmatprep.subr.mxu0 0.0
    %245 = vmatpush1.msra.mxu0 %v218
    %246 = vmatprep.subr.mxu0 0.0
    %247 = vmatpush1.msra.mxu0 %v219
    %248 = vmatprep.subr.mxu0 0.0
    %249 = vmatpush1.msra.mxu0 %v220
    %250 = vmatprep.subr.mxu0 0.0
    %251 = vmatpush1.msra.mxu0 %v221
    %252 = vmatprep.subr.mxu0 0.0
    %253 = vmatpush1.msra.mxu0 %v222
    %254 = vmatprep.subr.mxu0 0.0
    %255 = vmatpush1.msra.mxu0 %v223
    %256 = vmatprep.subr.mxu0 0.0
    %257 = vmatpush1.msra.mxu0 %v224
    %258 = vmatprep.subr.mxu0 0.0
    %259 = vmatpush1.msra.mxu0 %v225
    %260 = vmatprep.subr.mxu0 0.0
    %261 = vmatpush1.msra.mxu0 %v226
    %262 = vmatprep.subr.mxu0 0.0
    %263 = vmatpush1.msra.mxu0 %v227
    %264 = vmatprep.subr.mxu0 0.0
    %265 = vmatpush1.msra.mxu0 %v228
    %266 = vmatprep.subr.mxu0 0.0
    %267 = vmatpush1.msra.mxu0 %v229
    %268 = vmatprep.subr.mxu0 0.0
    %269 = vmatpush1.msra.mxu0 %v230
    %270 = vmatprep.subr.mxu0 0.0
    %271 = vmatpush1.msra.mxu0 0.0
    %272 = vmatprep.subr.mxu0 0.0
    %273 = vmatpush1.msra.mxu0 0.0
    %274 = vmatprep.subr.mxu0 0.0
    %275 = vmatpush1.msra.mxu0 0.0
    %276 = vmatprep.subr.mxu0 0.0
    %277 = vmatpush1.msra.mxu0 0.0
    %278 = vmatprep.subr.mxu0 0.0
    %279 = vmatpush1.msra.mxu0 0.0
    %280 = vmatprep.subr.mxu0 0.0
    %281 = vmatpush1.msra.mxu0 0.0
    %282 = vmatprep.subr.mxu0 0.0
    %283 = vmatpush1.msra.mxu0 0.0
    %284 = vmatprep.subr.mxu0 0.0
    %285 = vmatpush1.msra.mxu0 0.0
    %286 = vmatprep.subr.mxu0 0.0
    %287 = vmatpush1.msra.mxu0 0.0
    %288 = vmatprep.subr.mxu0 0.0
    %289 = vmatpush1.msra.mxu0 0.0
    %290 = vmatprep.subr.mxu0 0.0
    %291 = vmatpush1.msra.mxu0 0.0
    %292 = vmatprep.subr.mxu0 0.0
    %293 = vmatpush1.msra.mxu0 0.0
    %294 = vmatprep.subr.mxu0 0.0
    %295 = vmatpush1.msra.mxu0 0.0
    %296 = vmatprep.subr.mxu0 0.0
    %297 = vmatpush1.msra.mxu0 0.0
    %298 = vmatprep.subr.mxu0 0.0
    %299 = vmatpush1.msra.mxu0 0.0
    %300 = vmatprep.subr.mxu0 0.0
    %301 = vmatpush1.msra.mxu0 0.0
    %302 = vmatprep.mubr.f32.mxu0 0.0
    %303 = vmatmul.mubr.f32.gmra.mrb[0].mxu0 %v213
    %v304 = vpop.f32.mrb[0].mxu0
    %v305 = vadd.f32 %v236, %v304
    %v306 = vpop.f32.mrb[0].mxu0
    %307 = vmatprep.mubr.f32.mxu0 0.0
    %308 = vmatmul.mubr.f32.gmra.mrb[0].mxu0 %v214
    %v309 = vpop.f32.mrb[0].mxu0
    %v310 = vadd.f32 %v236, %v309
    %v311 = vpop.f32.mrb[0].mxu0
    %312 = vdwg.mxu0
    %v313 = vsub.f32 0.0, %v305
    %v314 = vsub.f32 0.0, %v310
    %v315 = vmul.f32 %v313, 1.442695
    %v316 = vpow.pop %v315
    %v317 = vmul.f32 %v314, 1.442695
    %v318 = vpow.pop %v317
    %v319 = vadd.f32 %v316, 1.0
    %v320 = vadd.f32 %v318, 1.0
    %v321 = vrcp.pop %v319
    %v322 = vmul.f32 1.0, %v321
    %v323 = vrcp.pop %v320
    %v324 = vmul.f32 1.0, %v323
    %v325 = vsub.f32 %v29, %v31
    %v326 = vsub.f32 %v30, %v32
    %328 = vset.pattern.permute.xlu0 0
    %329 = vperm.xlu0 %328, %v322
    %v330 = vpop.permute.xlu0 %329
    %333 = vset.pattern.permute.xlu0 0
    %334 = vperm.xlu0 %333, %v324
    %v335 = vpop.permute.xlu0 %334
    %v337 = vmul.f32 %v330, %v325
    %v338 = vmul.f32 %v335, %v326
    %v339 = vadd.f32 %v31, %v337
    %v340 = vadd.f32 %v32, %v338
    %341 = vst.msk [vmem:[#allocation3] sm:$0xff] %vm41, %v339
    %342 = vst.msk [vmem:[#allocation3 + $0x8] sm:$0xff] %vm41, %v340
    // Predicated region
    $region30: #{tpu_custom_call.1} parent=1 // pred_check
      _
    $region31: #{tpu_custom_call.1} parent=1 // pred_check_branch
      %344 = sbr.rel (0) target = $region33
    $region32: #{tpu_custom_call.1} parent=1 // pred_region
      %s346 = ssub.s32 256, 256
      %347 = vsyncadd [#allocation4], %s346
      %s348 = sshll.u32 [#allocation3], 4
      %s349 = int_to_ptr.vmem [resolvable:$true] %s348
      %354 = dma.vmem_to_hbm [thread:$0]  %s349, 256, %s7, [#allocation4], 128, 128, 8
    $region33: #{tpu_custom_call.1} parent=1 // pred_fallthru
      _
    // Predicated region
    $region34: #{tpu_custom_call.1} parent=1 // pred_check
      _
    $region35: #{tpu_custom_call.1} parent=1 // pred_check_branch
      %356 = sbr.rel (0) target = $region37
    $region36: #{tpu_custom_call.1} parent=1 // pred_region
      %357 = dma.done [#allocation4], 256
    $region37: #{tpu_custom_call.1} parent=1 // pred_fallthru
      _
    %358 = vsyncpa [#allocation4], 1

</llo_original>
